<compile_context>
chip_gen: v6e
topology: v6e:2x2x1
jax: 0.10.0
libtpu: 0.0.40
codegen_flags: <defaults>
</compile_context>

<pallas_src>
import jax
import jax.numpy as jnp
from jax.experimental import pallas as pl
from jax.experimental.pallas import tpu as pltpu

STRIDE = 5
KSIZE = 5
PAD = 2


def _convt_outer_kernel(x_ref, w_ref, o_ref):
    # x_ref: (G, HW)   w_ref: (G, KK)   o_ref: (G, KK, HW)
    #   G  = N * C * K        (batch * groups * per-group-out-channels)
    #   KK = kh * kw = 25
    #   HW = H * W  (lane-dense: 256 for the test shapes)
    # o[g, pq, hw] = x[g, hw] * w[g, pq]   -- one full-lane outer product per sublane row.
    x = x_ref[...]                               # (G, HW)
    wt = w_ref[...]                              # (G, KK)
    o_ref[...] = wt[:, :, None] * x[:, None, :]  # (G, KK, HW)


def conv_transpose2d_grouped(x, w):
    """x: (N, C, H, W) f32; w: (C, K, 5, 5) f32 (groups == C). Returns (N, C*K, 5H-4, 5W-4)."""
    N, C, H, W = x.shape
    Cw, K, kh, kw = w.shape
    assert Cw == C and kh == KSIZE and kw == KSIZE
    HW = H * W
    KK = kh * kw
    G = N * C * K
    Hout = (H - 1) * STRIDE - 2 * PAD + (kh - 1) + 1   # = 5H - 4
    Wout = (W - 1) * STRIDE - 2 * PAD + (kw - 1) + 1   # = 5W - 4

    # Flatten so the kernel sees lane-dense 2-D / 3-D slabs (last dim = H*W).
    x_flat = jnp.broadcast_to(x.reshape(N, C, 1, HW), (N, C, K, HW)).reshape(G, HW)
    w_flat = jnp.broadcast_to(w.reshape(1, C, K, KK), (N, C, K, KK)).reshape(G, KK)

    y = pl.pallas_call(
        _convt_outer_kernel,
        out_shape=jax.ShapeDtypeStruct((G, KK, HW), x.dtype),
        in_specs=[
            pl.BlockSpec(memory_space=pltpu.MemorySpace.VMEM),
            pl.BlockSpec(memory_space=pltpu.MemorySpace.VMEM),
        ],
        out_specs=pl.BlockSpec(memory_space=pltpu.MemorySpace.VMEM),
    )(x_flat, w_flat)

    # Layout plumbing outside the kernel: interleave the 5x5 blocks spatially and crop.
    y = y.reshape(N, C * K, kh, kw, H, W)              # [n, ck, p, q, h, w]
    y = jnp.transpose(y, (0, 1, 4, 2, 5, 3))           # [n, ck, h, p, w, q]
    y = y.reshape(N, C * K, kh * H, kw * W)            # y_full[n, ck, 5h+p, 5w+q]
    return y[:, :, PAD:PAD + Hout, PAD:PAD + Wout]


def _reference(x, w):
    """Pure-JAX reference of the same transposed conv (stride == kernel, then crop padding)."""
    N, C, H, W = x.shape
    _, K, kh, kw = w.shape
    y = jnp.einsum("nchw,ckpq->nckhpwq", x, w)          # (N, C, K, H, 5, W, 5)
    y = y.reshape(N, C * K, STRIDE * H, STRIDE * W)
    return y[:, :, PAD:STRIDE * H - PAD, PAD:STRIDE * W - PAD]


if __name__ == "__main__":
    key = jax.random.PRNGKey(0)
    kx, kw = jax.random.split(key)

    # Small shapes consistent with the module: grouped (depthwise) transposed conv.
    N, C, H, W = 2, 4, 16, 16
    K = 1  # out_channels // groups

    x = jax.random.normal(kx, (N, C, H, W), dtype=jnp.float32)
    # Deterministic weight init (uniform, roughly kaiming-scaled like PyTorch default).
    fan_in = (C // C) * KSIZE * KSIZE  # per-group fan-in
    bound = 1.0 / (fan_in ** 0.5)
    w = jax.random.uniform(kw, (C, K, KSIZE, KSIZE), dtype=jnp.float32,
                           minval=-bound, maxval=bound)

    out = conv_transpose2d_grouped(x, w)
    out = jax.block_until_ready(out)

    ref = _reference(x, w)
    assert out.shape == (N, C * K, STRIDE * H - 2 * PAD, STRIDE * W - 2 * PAD), out.shape
    assert jnp.allclose(out, ref, atol=1e-5, rtol=1e-5), "mismatch vs reference"

    print("KERNEL_OK")
</pallas_src>

<mosaic_0001>
module attributes {stable_mosaic.version = 11 : i64} {
  func.func @_convt_outer_kernel(%arg0: memref<8x256xf32, #tpu.memory_space<vmem>>, %arg1: memref<8x25xf32, #tpu.memory_space<vmem>>, %arg2: memref<8x25x256xf32, #tpu.memory_space<vmem>>) attributes {dimension_semantics = [], scalar_prefetch = 0 : i64, scratch_operands = 0 : i64, tpu.core_type = #tpu.core_type<tc>} {
    %c0 = arith.constant 0 : index
    %c0_0 = arith.constant 0 : index
    %0 = vector.load %arg0[%c0, %c0_0] : memref<8x256xf32, #tpu.memory_space<vmem>>, vector<8x256xf32>
    %c0_1 = arith.constant 0 : index
    %c0_2 = arith.constant 0 : index
    %1 = vector.load %arg1[%c0_1, %c0_2] : memref<8x25xf32, #tpu.memory_space<vmem>>, vector<8x25xf32>
    %2 = vector.shape_cast %1 : vector<8x25xf32> to vector<8x25x1xf32>
    %3 = vector.shape_cast %0 : vector<8x256xf32> to vector<8x1x256xf32>
    %4 = vector.broadcast %2 : vector<8x25x1xf32> to vector<8x25x256xf32>
    %5 = vector.broadcast %3 : vector<8x1x256xf32> to vector<8x25x256xf32>
    %6 = arith.mulf %4, %5 : vector<8x25x256xf32>
    %c0_3 = arith.constant 0 : index
    %c0_4 = arith.constant 0 : index
    %c0_5 = arith.constant 0 : index
    %7 = vector.load %arg2[%c0_3, %c0_4, %c0_5] : memref<8x25x256xf32, #tpu.memory_space<vmem>>, vector<8x25x256xf32>
    tpu.vector_store %arg2[%c0_3, %c0_4, %c0_5], %6 {strides = array<i32>} : memref<8x25x256xf32, #tpu.memory_space<vmem>>, vector<8x25x256xf32>,
    return
  }
}

</mosaic_0001>

<llo_original>
// kernel: tpu_custom_call.1
$region0: #{tpu_custom_call.1}
  #allocation0 [shape = 'u32[]', space=smem, size = 0x4, offset = 0x4, fixed_abs, tag = 'smem constant byte address 0x4 - core index']
  #allocation1 [shape = 'u32[144,128]{1,0:T(1,128)}', space=vmem, size = 0x12000, scoped, tag = 'internal scratch']
  %s0 = inlined_call_operand.hbm [shape: f32[8,256], index: 0, kind: input, shape index: {}]
  %s1 = inlined_call_operand.hbm [shape: f32[8,25], index: 1, kind: input, shape index: {}]
  %s2 = inlined_call_operand.vmem [shape: f32[8,25,256], index: 2, kind: output, shape index: {}]
  %s3 = sld [smem:[#allocation0]]
  $region26: #{tpu_custom_call.1} parent=0
    _
  %s5 = ssub.s32 1, %s3
  %s6 = scalar_select 0, %s5, %s3
  $region1: #{tpu_custom_call.1} parent=0
    #allocation2 [shape = 'u8[8192]{0}', space=vmem, size = 0x2000, scoped, tag = 'input window, operand 0, single buffered']
    #allocation3 [shape = 's32[1]{0}', space=sflag, size = 0x4, scoped, tag = 'scoped memory for tpu_custom_call.1']
    #allocation4 [shape = 'u8[4096]{0}', space=vmem, size = 0x1000, scoped, tag = 'input window, operand 1, single buffered']
    #allocation5 [shape = 's32[1]{0}', space=sflag, size = 0x4, scoped, tag = 'scoped memory for tpu_custom_call.1']
    %7 = vsyncpa [#allocation3], 0
    %8 = vsyncpa [#allocation5], 0
    // Predicated region
    $region2: #{tpu_custom_call.1} parent=1 // pred_check
      _
    $region3: #{tpu_custom_call.1} parent=1 // pred_check_branch
      %10 = sbr.rel (0) target = $region5
    $region4: #{tpu_custom_call.1} parent=1 // pred_region
      %s12 = ssub.s32 256, 256
      %13 = vsyncadd [#allocation3], %s12
      %s15 = sshll.u32 [#allocation2], 4
      %s16 = int_to_ptr.vmem [resolvable:$true] %s15
      %18 = dma.hbm_to_vmem [thread:$0]  %s0, 256, %s16, [#allocation3]
    $region5: #{tpu_custom_call.1} parent=1 // pred_fallthru
      _
    // Predicated region
    $region6: #{tpu_custom_call.1} parent=1 // pred_check
      _
    $region7: #{tpu_custom_call.1} parent=1 // pred_check_branch
      %20 = sbr.rel (0) target = $region9
    $region8: #{tpu_custom_call.1} parent=1 // pred_region
      %s22 = ssub.s32 128, 128
      %23 = vsyncadd [#allocation5], %s22
      %s25 = sshll.u32 [#allocation4], 4
      %s26 = int_to_ptr.vmem [resolvable:$true] %s25
      %28 = dma.hbm_to_vmem [thread:$0]  %s1, 128, %s26, [#allocation5]
    $region9: #{tpu_custom_call.1} parent=1 // pred_fallthru
      _
    // Predicated region
    $region10: #{tpu_custom_call.1} parent=1 // pred_check
      _
    $region11: #{tpu_custom_call.1} parent=1 // pred_check_branch
      %30 = sbr.rel (0) target = $region13
    $region12: #{tpu_custom_call.1} parent=1 // pred_region
      %31 = dma.done [#allocation3], 256
    $region13: #{tpu_custom_call.1} parent=1 // pred_fallthru
      _
    // Predicated region
    $region14: #{tpu_custom_call.1} parent=1 // pred_check
      _
    $region15: #{tpu_custom_call.1} parent=1 // pred_check_branch
      %33 = sbr.rel (0) target = $region17
    $region16: #{tpu_custom_call.1} parent=1 // pred_region
      %34 = dma.done [#allocation5], 128
    $region17: #{tpu_custom_call.1} parent=1 // pred_fallthru
      _
    %v35 = vld [vmem:[#allocation2] sm:$0xff]
    %v36 = vld [vmem:[#allocation2 + $0x8] sm:$0xff]
    %v37 = vld [vmem:[#allocation4] sm:$0xff]
    %v38 = vlaneseq
    %v39 = vshrl.u32 %v38, 7
    %v40 = vsub.s32 0, %v39
    %v41 = vrot.slane %v37, %v40
    %43 = vbcast.lane.b32.xlu0 %v41, 256
    %v44 = vpop.permute.xlu0 %43
    %s46 = sor.u32 256, 8
    %47 = vbcast.lane.b32.xlu0 %v41, %s46
    %v48 = vpop.permute.xlu0 %47
    %s50 = sor.u32 256, 16
    %51 = vbcast.lane.b32.xlu0 %v41, %s50
    %v52 = vpop.permute.xlu0 %51
    %s54 = sor.u32 256, 24
    %55 = vbcast.lane.b32.xlu0 %v41, %s54
    %v56 = vpop.permute.xlu0 %55
    %v57 = vlaneseq
    %v58 = vshrl.u32 %v57, 7
    %v59 = vsub.s32 1, %v58
    %v60 = vrot.slane %v37, %v59
    %62 = vbcast.lane.b32.xlu0 %v60, 256
    %v63 = vpop.permute.xlu0 %62
    %s65 = sor.u32 256, 8
    %66 = vbcast.lane.b32.xlu0 %v60, %s65
    %v67 = vpop.permute.xlu0 %66
    %s69 = sor.u32 256, 16
    %70 = vbcast.lane.b32.xlu0 %v60, %s69
    %v71 = vpop.permute.xlu0 %70
    %s73 = sor.u32 256, 24
    %74 = vbcast.lane.b32.xlu0 %v60, %s73
    %v75 = vpop.permute.xlu0 %74
    %v76 = vlaneseq
    %v77 = vshrl.u32 %v76, 7
    %v78 = vsub.s32 2, %v77
    %v79 = vrot.slane %v37, %v78
    %81 = vbcast.lane.b32.xlu0 %v79, 256
    %v82 = vpop.permute.xlu0 %81
    %s84 = sor.u32 256, 8
    %85 = vbcast.lane.b32.xlu0 %v79, %s84
    %v86 = vpop.permute.xlu0 %85
    %s88 = sor.u32 256, 16
    %89 = vbcast.lane.b32.xlu0 %v79, %s88
    %v90 = vpop.permute.xlu0 %89
    %s92 = sor.u32 256, 24
    %93 = vbcast.lane.b32.xlu0 %v79, %s92
    %v94 = vpop.permute.xlu0 %93
    %v95 = vlaneseq
    %v96 = vshrl.u32 %v95, 7
    %v97 = vsub.s32 3, %v96
    %v98 = vrot.slane %v37, %v97
    %100 = vbcast.lane.b32.xlu0 %v98, 256
    %v101 = vpop.permute.xlu0 %100
    %s103 = sor.u32 256, 8
    %104 = vbcast.lane.b32.xlu0 %v98, %s103
    %v105 = vpop.permute.xlu0 %104
    %s107 = sor.u32 256, 16
    %108 = vbcast.lane.b32.xlu0 %v98, %s107
    %v109 = vpop.permute.xlu0 %108
    %s111 = sor.u32 256, 24
    %112 = vbcast.lane.b32.xlu0 %v98, %s111
    %v113 = vpop.permute.xlu0 %112
    %v114 = vlaneseq
    %v115 = vshrl.u32 %v114, 7
    %v116 = vsub.s32 4, %v115
    %v117 = vrot.slane %v37, %v116
    %119 = vbcast.lane.b32.xlu0 %v117, 256
    %v120 = vpop.permute.xlu0 %119
    %s122 = sor.u32 256, 8
    %123 = vbcast.lane.b32.xlu0 %v117, %s122
    %v124 = vpop.permute.xlu0 %123
    %s126 = sor.u32 256, 16
    %127 = vbcast.lane.b32.xlu0 %v117, %s126
    %v128 = vpop.permute.xlu0 %127
    %s130 = sor.u32 256, 24
    %131 = vbcast.lane.b32.xlu0 %v117, %s130
    %v132 = vpop.permute.xlu0 %131
    %v133 = vlaneseq
    %v134 = vshrl.u32 %v133, 7
    %v135 = vsub.s32 5, %v134
    %v136 = vrot.slane %v37, %v135
    %138 = vbcast.lane.b32.xlu0 %v136, 256
    %v139 = vpop.permute.xlu0 %138
    %s141 = sor.u32 256, 8
    %142 = vbcast.lane.b32.xlu0 %v136, %s141
    %v143 = vpop.permute.xlu0 %142
    %s145 = sor.u32 256, 16
    %146 = vbcast.lane.b32.xlu0 %v136, %s145
    %v147 = vpop.permute.xlu0 %146
    %s149 = sor.u32 256, 24
    %150 = vbcast.lane.b32.xlu0 %v136, %s149
    %v151 = vpop.permute.xlu0 %150
    %v152 = vlaneseq
    %v153 = vshrl.u32 %v152, 7
    %v154 = vsub.s32 6, %v153
    %v155 = vrot.slane %v37, %v154
    %157 = vbcast.lane.b32.xlu0 %v155, 256
    %v158 = vpop.permute.xlu0 %157
    %s160 = sor.u32 256, 8
    %161 = vbcast.lane.b32.xlu0 %v155, %s160
    %v162 = vpop.permute.xlu0 %161
    %s164 = sor.u32 256, 16
    %165 = vbcast.lane.b32.xlu0 %v155, %s164
    %v166 = vpop.permute.xlu0 %165
    %s168 = sor.u32 256, 24
    %169 = vbcast.lane.b32.xlu0 %v155, %s168
    %v170 = vpop.permute.xlu0 %169
    %v171 = vlaneseq
    %v172 = vshrl.u32 %v171, 7
    %v173 = vsub.s32 7, %v172
    %v174 = vrot.slane %v37, %v173
    %176 = vbcast.lane.b32.xlu0 %v174, 256
    %v177 = vpop.permute.xlu0 %176
    %s179 = sor.u32 256, 8
    %180 = vbcast.lane.b32.xlu0 %v174, %s179
    %v181 = vpop.permute.xlu0 %180
    %s183 = sor.u32 256, 16
    %184 = vbcast.lane.b32.xlu0 %v174, %s183
    %v185 = vpop.permute.xlu0 %184
    %s187 = sor.u32 256, 24
    %188 = vbcast.lane.b32.xlu0 %v174, %s187
    %v189 = vpop.permute.xlu0 %188
    %v192 = vcombine.low %v35, %v36
    %v193 = vcombine.high %v35, %v36
    %v195 = vunpack.c.l.s4 1966171168
    %v196 = vunpack.c.0.s8 %v195
    %v197 = vlaneseq
    %v198 = vshrl.u32 %v197, 7
    %v199 = vsub.s32 %v196, %v198
    %v200 = vrot.slane %v192, %v199
    %v202 = vunpack.c.l.s4 1966171168
    %v203 = vunpack.c.0.s8 %v202
    %v204 = vlaneseq
    %v205 = vshrl.u32 %v204, 7
    %v206 = vsub.s32 %v203, %v205
    %v207 = vrot.slane %v193, %v206
    %v208 = vcombine.high %v200, %v200
    %v209 = vcombine.high %v207, %v207
    %v211 = vunpack.c.l.s4 1966171168
    %v212 = vunpack.c.0.s8 %v211
    %v213 = vlaneseq
    %v214 = vshrl.u32 %v213, 7
    %v215 = vsub.s32 %v212, %v214
    %v216 = vrot.slane %v200, %v215
    %v218 = vunpack.c.l.s4 1966171168
    %v219 = vunpack.c.0.s8 %v218
    %v220 = vlaneseq
    %v221 = vshrl.u32 %v220, 7
    %v222 = vsub.s32 %v219, %v221
    %v223 = vrot.slane %v207, %v222
    %v225 = vunpack.c.l.s4 1966171168
    %v226 = vunpack.c.0.s8 %v225
    %v227 = vlaneseq
    %v228 = vshrl.u32 %v227, 7
    %v229 = vsub.s32 %v226, %v228
    %v230 = vrot.slane %v208, %v229
    %v232 = vunpack.c.l.s4 1966171168
    %v233 = vunpack.c.0.s8 %v232
    %v234 = vlaneseq
    %v235 = vshrl.u32 %v234, 7
    %v236 = vsub.s32 %v233, %v235
    %v237 = vrot.slane %v209, %v236
    %v238 = vcombine.high %v216, %v216
    %v239 = vcombine.high %v223, %v223
    %v240 = vcombine.high %v230, %v230
    %v241 = vcombine.high %v237, %v237
    %v242 = vlaneseq
    %v243 = vshrl.u32 %v242, 7
    %v244 = vsub.s32 0, %v243
    %v245 = vrot.slane %v216, %v244
    %v246 = vlaneseq
    %v247 = vshrl.u32 %v246, 7
    %v248 = vsub.s32 1, %v247
    %v249 = vrot.slane %v216, %v248
    %v250 = vlaneseq
    %v251 = vshrl.u32 %v250, 7
    %v252 = vsub.s32 0, %v251
    %v253 = vrot.slane %v230, %v252
    %v254 = vlaneseq
    %v255 = vshrl.u32 %v254, 7
    %v256 = vsub.s32 1, %v255
    %v257 = vrot.slane %v230, %v256
    %v258 = vlaneseq
    %v259 = vshrl.u32 %v258, 7
    %v260 = vsub.s32 0, %v259
    %v261 = vrot.slane %v238, %v260
    %v262 = vlaneseq
    %v263 = vshrl.u32 %v262, 7
    %v264 = vsub.s32 1, %v263
    %v265 = vrot.slane %v238, %v264
    %v266 = vlaneseq
    %v267 = vshrl.u32 %v266, 7
    %v268 = vsub.s32 0, %v267
    %v269 = vrot.slane %v240, %v268
    %v270 = vlaneseq
    %v271 = vshrl.u32 %v270, 7
    %v272 = vsub.s32 1, %v271
    %v273 = vrot.slane %v240, %v272
    %v274 = vlaneseq
    %v275 = vshrl.u32 %v274, 7
    %v276 = vsub.s32 0, %v275
    %v277 = vrot.slane %v223, %v276
    %v278 = vlaneseq
    %v279 = vshrl.u32 %v278, 7
    %v280 = vsub.s32 1, %v279
    %v281 = vrot.slane %v223, %v280
    %v282 = vlaneseq
    %v283 = vshrl.u32 %v282, 7
    %v284 = vsub.s32 0, %v283
    %v285 = vrot.slane %v237, %v284
    %v286 = vlaneseq
    %v287 = vshrl.u32 %v286, 7
    %v288 = vsub.s32 1, %v287
    %v289 = vrot.slane %v237, %v288
    %v290 = vlaneseq
    %v291 = vshrl.u32 %v290, 7
    %v292 = vsub.s32 0, %v291
    %v293 = vrot.slane %v239, %v292
    %v294 = vlaneseq
    %v295 = vshrl.u32 %v294, 7
    %v296 = vsub.s32 1, %v295
    %v297 = vrot.slane %v239, %v296
    %v298 = vlaneseq
    %v299 = vshrl.u32 %v298, 7
    %v300 = vsub.s32 0, %v299
    %v301 = vrot.slane %v241, %v300
    %v302 = vlaneseq
    %v303 = vshrl.u32 %v302, 7
    %v304 = vsub.s32 1, %v303
    %v305 = vrot.slane %v241, %v304
    %v322 = vmul.f32 %v44, %v245
    %v323 = vmul.f32 %v44, %v249
    %v324 = vmul.f32 %v48, %v245
    %v325 = vmul.f32 %v48, %v249
    %v326 = vmul.f32 %v52, %v245
    %v327 = vmul.f32 %v52, %v249
    %v328 = vmul.f32 %v56, %v245
    %v329 = vmul.f32 %v56, %v249
    %v330 = vmul.f32 %v63, %v253
    %v331 = vmul.f32 %v63, %v257
    %v332 = vmul.f32 %v67, %v253
    %v333 = vmul.f32 %v67, %v257
    %v334 = vmul.f32 %v71, %v253
    %v335 = vmul.f32 %v71, %v257
    %v336 = vmul.f32 %v75, %v253
    %v337 = vmul.f32 %v75, %v257
    %v338 = vmul.f32 %v82, %v261
    %v339 = vmul.f32 %v82, %v265
    %v340 = vmul.f32 %v86, %v261
    %v341 = vmul.f32 %v86, %v265
    %v342 = vmul.f32 %v90, %v261
    %v343 = vmul.f32 %v90, %v265
    %v344 = vmul.f32 %v94, %v261
    %v345 = vmul.f32 %v94, %v265
    %v346 = vmul.f32 %v101, %v269
    %v347 = vmul.f32 %v101, %v273
    %v348 = vmul.f32 %v105, %v269
    %v349 = vmul.f32 %v105, %v273
    %v350 = vmul.f32 %v109, %v269
    %v351 = vmul.f32 %v109, %v273
    %v352 = vmul.f32 %v113, %v269
    %v353 = vmul.f32 %v113, %v273
    %v354 = vmul.f32 %v120, %v277
    %v355 = vmul.f32 %v120, %v281
    %v356 = vmul.f32 %v124, %v277
    %v357 = vmul.f32 %v124, %v281
    %v358 = vmul.f32 %v128, %v277
    %v359 = vmul.f32 %v128, %v281
    %v360 = vmul.f32 %v132, %v277
    %v361 = vmul.f32 %v132, %v281
    %v362 = vmul.f32 %v139, %v285
    %v363 = vmul.f32 %v139, %v289
    %v364 = vmul.f32 %v143, %v285
    %v365 = vmul.f32 %v143, %v289
    %v366 = vmul.f32 %v147, %v285
    %v367 = vmul.f32 %v147, %v289
    %v368 = vmul.f32 %v151, %v285
    %v369 = vmul.f32 %v151, %v289
    %v370 = vmul.f32 %v158, %v293
    %v371 = vmul.f32 %v158, %v297
    %v372 = vmul.f32 %v162, %v293
    %v373 = vmul.f32 %v162, %v297
    %v374 = vmul.f32 %v166, %v293
    %v375 = vmul.f32 %v166, %v297
    %v376 = vmul.f32 %v170, %v293
    %v377 = vmul.f32 %v170, %v297
    %v378 = vmul.f32 %v177, %v301
    %v379 = vmul.f32 %v177, %v305
    %v380 = vmul.f32 %v181, %v301
    %v381 = vmul.f32 %v181, %v305
    %v382 = vmul.f32 %v185, %v301
    %v383 = vmul.f32 %v185, %v305
    %v384 = vmul.f32 %v189, %v301
    %v385 = vmul.f32 %v189, %v305
    %386 = vst [vmem:[%s2] sm:$0xff] %v322
    %387 = vst [vmem:[%s2 + $0x8] sm:$0xff] %v323
    %388 = vst [vmem:[%s2 + $0x10] sm:$0xff] %v324
    %389 = vst [vmem:[%s2 + $0x18] sm:$0xff] %v325
    %390 = vst [vmem:[%s2 + $0x20] sm:$0xff] %v326
    %391 = vst [vmem:[%s2 + $0x28] sm:$0xff] %v327
    %392 = vst [vmem:[%s2 + $0x30] sm:$0x1] %v328
    %393 = vst [vmem:[%s2 + $0x38] sm:$0x1] %v329
    %394 = vst [vmem:[%s2 + $0x40] sm:$0xff] %v330
    %395 = vst [vmem:[%s2 + $0x48] sm:$0xff] %v331
    %396 = vst [vmem:[%s2 + $0x50] sm:$0xff] %v332
    %397 = vst [vmem:[%s2 + $0x58] sm:$0xff] %v333
    %398 = vst [vmem:[%s2 + $0x60] sm:$0xff] %v334
    %399 = vst [vmem:[%s2 + $0x68] sm:$0xff] %v335
    %400 = vst [vmem:[%s2 + $0x70] sm:$0x1] %v336
    %401 = vst [vmem:[%s2 + $0x78] sm:$0x1] %v337
    %402 = vst [vmem:[%s2 + $0x80] sm:$0xff] %v338
    %403 = vst [vmem:[%s2 + $0x88] sm:$0xff] %v339
    %404 = vst [vmem:[%s2 + $0x90] sm:$0xff] %v340
    %405 = vst [vmem:[%s2 + $0x98] sm:$0xff] %v341
    %406 = vst [vmem:[%s2 + $0xa0] sm:$0xff] %v342
    %407 = vst [vmem:[%s2 + $0xa8] sm:$0xff] %v343
    %408 = vst [vmem:[%s2 + $0xb0] sm:$0x1] %v344
    %409 = vst [vmem:[%s2 + $0xb8] sm:$0x1] %v345
    %410 = vst [vmem:[%s2 + $0xc0] sm:$0xff] %v346
    %411 = vst [vmem:[%s2 + $0xc8] sm:$0xff] %v347
    %412 = vst [vmem:[%s2 + $0xd0] sm:$0xff] %v348
    %413 = vst [vmem:[%s2 + $0xd8] sm:$0xff] %v349
    %414 = vst [vmem:[%s2 + $0xe0] sm:$0xff] %v350
    %415 = vst [vmem:[%s2 + $0xe8] sm:$0xff] %v351
    %416 = vst [vmem:[%s2 + $0xf0] sm:$0x1] %v352
    %417 = vst [vmem:[%s2 + $0xf8] sm:$0x1] %v353
    %418 = vst [vmem:[%s2 + $0x100] sm:$0xff] %v354
    %419 = vst [vmem:[%s2 + $0x108] sm:$0xff] %v355
    %420 = vst [vmem:[%s2 + $0x110] sm:$0xff] %v356
    %421 = vst [vmem:[%s2 + $0x118] sm:$0xff] %v357
    %422 = vst [vmem:[%s2 + $0x120] sm:$0xff] %v358
    %423 = vst [vmem:[%s2 + $0x128] sm:$0xff] %v359
    %424 = vst [vmem:[%s2 + $0x130] sm:$0x1] %v360
    %425 = vst [vmem:[%s2 + $0x138] sm:$0x1] %v361
    %426 = vst [vmem:[%s2 + $0x140] sm:$0xff] %v362
    %427 = vst [vmem:[%s2 + $0x148] sm:$0xff] %v363
    %428 = vst [vmem:[%s2 + $0x150] sm:$0xff] %v364
    %429 = vst [vmem:[%s2 + $0x158] sm:$0xff] %v365
    %430 = vst [vmem:[%s2 + $0x160] sm:$0xff] %v366
    %431 = vst [vmem:[%s2 + $0x168] sm:$0xff] %v367
    %432 = vst [vmem:[%s2 + $0x170] sm:$0x1] %v368
    %433 = vst [vmem:[%s2 + $0x178] sm:$0x1] %v369
    %434 = vst [vmem:[%s2 + $0x180] sm:$0xff] %v370
    %435 = vst [vmem:[%s2 + $0x188] sm:$0xff] %v371
    %436 = vst [vmem:[%s2 + $0x190] sm:$0xff] %v372
    %437 = vst [vmem:[%s2 + $0x198] sm:$0xff] %v373
    %438 = vst [vmem:[%s2 + $0x1a0] sm:$0xff] %v374
    %439 = vst [vmem:[%s2 + $0x1a8] sm:$0xff] %v375
    %440 = vst [vmem:[%s2 + $0x1b0] sm:$0x1] %v376
    %441 = vst [vmem:[%s2 + $0x1b8] sm:$0x1] %v377
    %442 = vst [vmem:[%s2 + $0x1c0] sm:$0xff] %v378
    %443 = vst [vmem:[%s2 + $0x1c8] sm:$0xff] %v379
    %444 = vst [vmem:[%s2 + $0x1d0] sm:$0xff] %v380
    %445 = vst [vmem:[%s2 + $0x1d8] sm:$0xff] %v381
    %446 = vst [vmem:[%s2 + $0x1e0] sm:$0xff] %v382
    %447 = vst [vmem:[%s2 + $0x1e8] sm:$0xff] %v383
    %448 = vst [vmem:[%s2 + $0x1f0] sm:$0x1] %v384
    %449 = vst [vmem:[%s2 + $0x1f8] sm:$0x1] %v385
    // Predicated region
    $region18: #{tpu_custom_call.1} parent=1 // pred_check
      _
    $region19: #{tpu_custom_call.1} parent=1 // pred_check_branch
      %451 = sbr.rel (0) target = $region21
    $region20: #{tpu_custom_call.1} parent=1 // pred_region
      _
    $region21: #{tpu_custom_call.1} parent=1 // pred_fallthru
      _
    // Predicated region
    $region22: #{tpu_custom_call.1} parent=1 // pred_check
      _
    $region23: #{tpu_custom_call.1} parent=1 // pred_check_branch
      %453 = sbr.rel (0) target = $region25
    $region24: #{tpu_custom_call.1} parent=1 // pred_region
      _
    $region25: #{tpu_custom_call.1} parent=1 // pred_fallthru
      _
    %454 = vsyncpa [#allocation3], 1
    %455 = vsyncpa [#allocation5], 1

</llo_original>
